<compile_context>
chip_gen: v7x
topology: tpu7x:2x2x1
jax: 0.10.0
libtpu: 0.0.40
codegen_flags: <defaults>
</compile_context>

<pallas_src>
import jax
import jax.numpy as jnp
from jax import lax
from jax.experimental import pallas as pl
from jax.experimental.pallas import tpu as pltpu

KH = KW = 5
PAD = 2


def _lp_ternary_kernel(w_ref, thr_ref, x_ref, o_ref):
    """One grid step = one lane-packed band of (image, channel) segments.

    w_ref:   VMEM (1, KH*KW, L) f32  per-lane tap weights (per-segment channel weight, lane-broadcast)
    thr_ref: VMEM (1, 1, L)     f32  per-lane dead-zone thresholds
    x_ref:   VMEM (1, R, L)     f32  zero-padded, lane-packed input band (R = H+2*PAD rounded up to 8)
    o_ref:   VMEM (1, R, L)     f32  lane-packed output band (halo rows/cols hold garbage, sliced off
                                     in the wrapper)
    """
    plane = x_ref[0]                       # (R, L), zero halos around every segment
    R, L = plane.shape

    acc = None
    for kh in range(KH):
        dh = kh - PAD                      # row shift in [-2, 2]
        # roll so that ph[i, :] == plane[(i + dh) % R, :]; valid rows never hit the wrap.
        ph = plane if dh == 0 else pltpu.roll(plane, shift=(-dh) % R, axis=0)
        for kw in range(KW):
            dw = kw - PAD                  # lane shift in [-2, 2]
            # sh[:, j] == ph[:, (j + dw) % L]; |dw| <= PAD keeps valid columns inside their segment.
            sh = ph if dw == 0 else pltpu.roll(ph, shift=(-dw) % L, axis=1)
            w_row = w_ref[0, pl.ds(kh * KW + kw, 1), :]      # (1, L) per-lane tap weight
            term = w_row * sh
            acc = term if acc is None else acc + term        # init from first tap (review #9)

    thr = thr_ref[0]                       # (1, L)
    y = jnp.where(jnp.abs(acc) > thr, acc, 0.0)
    o_ref[0] = y.astype(o_ref.dtype)


def _round_up(a, m):
    return (a + m - 1) // m * m


@jax.jit
def lp_gabor_frontend_forward(x, weight, beta=1.0):
    """LP front-end of LP_Gabor_Layer_v4 (eval mode).

    x: (N, C, H, W) f32, weight: (C, 1, 5, 5) f32 depthwise weights -> (N, C, H, W).
    """
    N, C, H, W = x.shape
    assert weight.shape == (C, 1, KH, KW)

    S = N * C                              # number of (image, channel) segments
    Wseg = W + 2 * PAD                     # per-segment padded width (own halo both sides)
    Hp = H + 2 * PAD
    R = _round_up(Hp, 8)                   # sublane-aligned rows
    L = 128 if Wseg <= 128 else _round_up(Wseg, 128)   # lane width of one band
    G = max(1, L // Wseg)                  # segments packed per band
    B = pl.cdiv(S, G)                      # number of bands = grid size
    # Roll-contamination safety: lane shifts are limited to +/-PAD and every segment has a PAD-wide
    # zero halo on both sides, so a rolled read from a valid output column always stays inside that
    # segment's [s*Wseg, (s+1)*Wseg) window and never wraps into lanes >= G*Wseg.
    assert G * Wseg <= L and Wseg == W + 2 * PAD

    xf = x.astype(jnp.float32)

    # ---- pack input: (N, C, H, W) -> (B, R, L), zero halos, lane-dense (wrapper layout plumbing) ----
    xp = jnp.pad(xf, ((0, 0), (0, 0), (PAD, PAD), (PAD, PAD)))            # (N, C, Hp, Wseg)
    xp = xp.reshape(S, Hp, Wseg)
    xp = jnp.pad(xp, ((0, B * G - S), (0, R - Hp), (0, 0)))               # (B*G, R, Wseg)
    xp = xp.reshape(B, G, R, Wseg).transpose(0, 2, 1, 3).reshape(B, R, G * Wseg)
    xp = jnp.pad(xp, ((0, 0), (0, 0), (0, L - G * Wseg)))                 # (B, R, L)

    # ---- per-lane tap weights: w_lanes[b, t, g*Wseg + j] = weight[channel(segment), kh, kw] ----
    wf = weight.astype(jnp.float32).reshape(C, KH * KW)                   # (C, 25)
    w_seg = jnp.tile(wf, (N, 1))                                          # (S, 25); segment s -> channel s % C
    w_seg = jnp.pad(w_seg, ((0, B * G - S), (0, 0))).reshape(B, G, KH * KW)
    w_lanes = jnp.broadcast_to(w_seg[:, :, None, :], (B, G, Wseg, KH * KW))
    w_lanes = w_lanes.transpose(0, 3, 1, 2).reshape(B, KH * KW, G * Wseg)
    w_lanes = jnp.pad(w_lanes, ((0, 0), (0, 0), (0, L - G * Wseg)))       # (B, 25, L)

    # ---- per-lane dead-zone thresholds: thr_c = eps * ||w_c||_1 (traced -> beta can be a jnp scalar) ----
    eps = jnp.asarray(beta, jnp.float32) * jnp.float32(8.0 / 255.0)
    thr_c = eps * jnp.sum(jnp.abs(weight.astype(jnp.float32)), axis=(1, 2, 3))   # (C,)
    thr_seg = jnp.pad(jnp.tile(thr_c, (N,)), ((0, B * G - S),)).reshape(B, G)
    thr_lanes = jnp.broadcast_to(thr_seg[:, :, None], (B, G, Wseg)).reshape(B, G * Wseg)
    thr_lanes = jnp.pad(thr_lanes, ((0, 0), (0, L - G * Wseg))).reshape(B, 1, L)

    band_bytes = R * L * 4
    vmem_limit = int(min(100 * 2**20, max(16 * 2**20, 8 * band_bytes)))

    out_pk = pl.pallas_call(
        _lp_ternary_kernel,
        grid=(B,),
        in_specs=[
            pl.BlockSpec((1, KH * KW, L), lambda b: (b, 0, 0)),           # per-lane tap weights
            pl.BlockSpec((1, 1, L), lambda b: (b, 0, 0)),                 # per-lane thresholds
            pl.BlockSpec((1, R, L), lambda b: (b, 0, 0)),                 # packed input band
        ],
        out_specs=pl.BlockSpec((1, R, L), lambda b: (b, 0, 0)),           # lane-dense packed output
        out_shape=jax.ShapeDtypeStruct((B, R, L), jnp.float32),
        compiler_params=pltpu.CompilerParams(
            dimension_semantics=("parallel",),
            vmem_limit_bytes=vmem_limit,
        ),
    )(w_lanes, thr_lanes, xp)

    # ---- unpack: (B, R, L) -> (N, C, H, W) ----
    o = out_pk[:, :, : G * Wseg].reshape(B, R, G, Wseg).transpose(0, 2, 1, 3)
    o = o.reshape(B * G, R, Wseg)[:S, PAD:PAD + H, PAD:PAD + W]
    return o.reshape(N, C, H, W).astype(x.dtype)


def lp_frontend_reference(x, weight, beta=1.0):
    """Pure-JAX reference (f32 conv) for correctness checking."""
    o = lax.conv_general_dilated(
        x, weight, window_strides=(1, 1), padding=((PAD, PAD), (PAD, PAD)),
        dimension_numbers=("NCHW", "OIHW", "NCHW"),
        feature_group_count=x.shape[1],
        precision=lax.Precision.HIGHEST)
    thr = (jnp.asarray(beta, jnp.float32) * 8.0 / 255.0) * jnp.sum(jnp.abs(weight), axis=(1, 2, 3))
    return jnp.where(jnp.abs(o) > thr[None, :, None, None], o, 0.0)


def make_lowpass_weight():
    """l1_normalizer(np.ones((5,5))) -> every tap 1/25, replicated per channel.

    Matches nn.Conv2d(3, 3, kernel_size=5, groups=3, bias=False).weight shape: (3, 1, 5, 5).
    """
    k2d = jnp.full((KH, KW), 1.0 / (KH * KW), dtype=jnp.float32)
    return jnp.tile(k2d[None, None, :, :], (3, 1, 1, 1))


if __name__ == "__main__":
    key = jax.random.PRNGKey(0)
    # Small image-like input: batch=2, channels=3 (module hard-codes 3), spatial=16.
    x = jax.random.uniform(key, (2, 3, 16, 16), dtype=jnp.float32)
    weight = make_lowpass_weight()

    out = jax.block_until_ready(lp_gabor_frontend_forward(x, weight, beta=1.0))
    ref = jax.block_until_ready(lp_frontend_reference(x, weight, beta=1.0))

    assert out.shape == ref.shape and out.dtype == ref.dtype
    assert jnp.allclose(out, ref, atol=1e-5, rtol=1e-5), "Pallas kernel mismatch vs reference"

    print("KERNEL_OK")
</pallas_src>

<mosaic_0001>
module attributes {stable_mosaic.version = 11 : i64} {
  func.func @_lp_ternary_kernel(%arg0: i32, %arg1: memref<1x25x128xf32, #tpu.memory_space<vmem>>, %arg2: memref<1x1x128xf32, #tpu.memory_space<vmem>>, %arg3: memref<1x24x128xf32, #tpu.memory_space<vmem>>, %arg4: memref<1x24x128xf32, #tpu.memory_space<vmem>>) attributes {dimension_semantics = [#tpu.dimension_semantics<parallel>], iteration_bounds = array<i64: 1>, scalar_prefetch = 0 : i64, scratch_operands = 0 : i64, tpu.core_type = #tpu.core_type<tc>, window_params = [{transform_indices = @transform_0, window_bounds = array<i64: 1, 25, 128>}, {transform_indices = @transform_1, window_bounds = array<i64: 1, 1, 128>}, {transform_indices = @transform_2, window_bounds = array<i64: 1, 24, 128>}, {transform_indices = @transform_3, window_bounds = array<i64: 1, 24, 128>}]} {
    %c0 = arith.constant 0 : index
    %c0_0 = arith.constant 0 : index
    %c0_1 = arith.constant 0 : index
    %0 = vector.load %arg3[%c0, %c0_0, %c0_1] : memref<1x24x128xf32, #tpu.memory_space<vmem>>, vector<1x24x128xf32>
    %1 = vector.shape_cast %0 : vector<1x24x128xf32> to vector<24x128xf32>
    %c2_i32 = arith.constant 2 : i32
    %2 = tpu.dynamic_rotate %1 by %c2_i32 dim 0 : vector<24x128xf32>, i32 -> vector<24x128xf32>
    %c2_i32_2 = arith.constant 2 : i32
    %3 = tpu.dynamic_rotate %2 by %c2_i32_2 dim 1 : vector<24x128xf32>, i32 -> vector<24x128xf32>
    %c0_3 = arith.constant 0 : index
    %c0_4 = arith.constant 0 : index
    %c0_5 = arith.constant 0 : index
    %4 = vector.load %arg1[%c0_3, %c0_4, %c0_5] : memref<1x25x128xf32, #tpu.memory_space<vmem>>, vector<1x1x128xf32>
    %5 = vector.shape_cast %4 : vector<1x1x128xf32> to vector<1x128xf32>
    %6 = vector.broadcast %5 : vector<1x128xf32> to vector<24x128xf32>
    %7 = arith.mulf %6, %3 : vector<24x128xf32>
    %c1_i32 = arith.constant 1 : i32
    %8 = tpu.dynamic_rotate %2 by %c1_i32 dim 1 : vector<24x128xf32>, i32 -> vector<24x128xf32>
    %c0_6 = arith.constant 0 : index
    %c1 = arith.constant 1 : index
    %c0_7 = arith.constant 0 : index
    %9 = vector.load %arg1[%c0_6, %c1, %c0_7] : memref<1x25x128xf32, #tpu.memory_space<vmem>>, vector<1x1x128xf32>
    %10 = vector.shape_cast %9 : vector<1x1x128xf32> to vector<1x128xf32>
    %11 = vector.broadcast %10 : vector<1x128xf32> to vector<24x128xf32>
    %12 = arith.mulf %11, %8 : vector<24x128xf32>
    %13 = arith.addf %7, %12 : vector<24x128xf32>
    %c0_8 = arith.constant 0 : index
    %c2 = arith.constant 2 : index
    %c0_9 = arith.constant 0 : index
    %14 = vector.load %arg1[%c0_8, %c2, %c0_9] : memref<1x25x128xf32, #tpu.memory_space<vmem>>, vector<1x1x128xf32>
    %15 = vector.shape_cast %14 : vector<1x1x128xf32> to vector<1x128xf32>
    %16 = vector.broadcast %15 : vector<1x128xf32> to vector<24x128xf32>
    %17 = arith.mulf %16, %2 : vector<24x128xf32>
    %18 = arith.addf %13, %17 : vector<24x128xf32>
    %c127_i32 = arith.constant 127 : i32
    %19 = tpu.dynamic_rotate %2 by %c127_i32 dim 1 : vector<24x128xf32>, i32 -> vector<24x128xf32>
    %c0_10 = arith.constant 0 : index
    %c3 = arith.constant 3 : index
    %c0_11 = arith.constant 0 : index
    %20 = vector.load %arg1[%c0_10, %c3, %c0_11] : memref<1x25x128xf32, #tpu.memory_space<vmem>>, vector<1x1x128xf32>
    %21 = vector.shape_cast %20 : vector<1x1x128xf32> to vector<1x128xf32>
    %22 = vector.broadcast %21 : vector<1x128xf32> to vector<24x128xf32>
    %23 = arith.mulf %22, %19 : vector<24x128xf32>
    %24 = arith.addf %18, %23 : vector<24x128xf32>
    %c126_i32 = arith.constant 126 : i32
    %25 = tpu.dynamic_rotate %2 by %c126_i32 dim 1 : vector<24x128xf32>, i32 -> vector<24x128xf32>
    %c0_12 = arith.constant 0 : index
    %c4 = arith.constant 4 : index
    %c0_13 = arith.constant 0 : index
    %26 = vector.load %arg1[%c0_12, %c4, %c0_13] : memref<1x25x128xf32, #tpu.memory_space<vmem>>, vector<1x1x128xf32>
    %27 = vector.shape_cast %26 : vector<1x1x128xf32> to vector<1x128xf32>
    %28 = vector.broadcast %27 : vector<1x128xf32> to vector<24x128xf32>
    %29 = arith.mulf %28, %25 : vector<24x128xf32>
    %30 = arith.addf %24, %29 : vector<24x128xf32>
    %c1_i32_14 = arith.constant 1 : i32
    %31 = tpu.dynamic_rotate %1 by %c1_i32_14 dim 0 : vector<24x128xf32>, i32 -> vector<24x128xf32>
    %c2_i32_15 = arith.constant 2 : i32
    %32 = tpu.dynamic_rotate %31 by %c2_i32_15 dim 1 : vector<24x128xf32>, i32 -> vector<24x128xf32>
    %c0_16 = arith.constant 0 : index
    %c5 = arith.constant 5 : index
    %c0_17 = arith.constant 0 : index
    %33 = vector.load %arg1[%c0_16, %c5, %c0_17] : memref<1x25x128xf32, #tpu.memory_space<vmem>>, vector<1x1x128xf32>
    %34 = vector.shape_cast %33 : vector<1x1x128xf32> to vector<1x128xf32>
    %35 = vector.broadcast %34 : vector<1x128xf32> to vector<24x128xf32>
    %36 = arith.mulf %35, %32 : vector<24x128xf32>
    %37 = arith.addf %30, %36 : vector<24x128xf32>
    %c1_i32_18 = arith.constant 1 : i32
    %38 = tpu.dynamic_rotate %31 by %c1_i32_18 dim 1 : vector<24x128xf32>, i32 -> vector<24x128xf32>
    %c0_19 = arith.constant 0 : index
    %c6 = arith.constant 6 : index
    %c0_20 = arith.constant 0 : index
    %39 = vector.load %arg1[%c0_19, %c6, %c0_20] : memref<1x25x128xf32, #tpu.memory_space<vmem>>, vector<1x1x128xf32>
    %40 = vector.shape_cast %39 : vector<1x1x128xf32> to vector<1x128xf32>
    %41 = vector.broadcast %40 : vector<1x128xf32> to vector<24x128xf32>
    %42 = arith.mulf %41, %38 : vector<24x128xf32>
    %43 = arith.addf %37, %42 : vector<24x128xf32>
    %c0_21 = arith.constant 0 : index
    %c7 = arith.constant 7 : index
    %c0_22 = arith.constant 0 : index
    %44 = vector.load %arg1[%c0_21, %c7, %c0_22] : memref<1x25x128xf32, #tpu.memory_space<vmem>>, vector<1x1x128xf32>
    %45 = vector.shape_cast %44 : vector<1x1x128xf32> to vector<1x128xf32>
    %46 = vector.broadcast %45 : vector<1x128xf32> to vector<24x128xf32>
    %47 = arith.mulf %46, %31 : vector<24x128xf32>
    %48 = arith.addf %43, %47 : vector<24x128xf32>
    %c127_i32_23 = arith.constant 127 : i32
    %49 = tpu.dynamic_rotate %31 by %c127_i32_23 dim 1 : vector<24x128xf32>, i32 -> vector<24x128xf32>
    %c0_24 = arith.constant 0 : index
    %c8 = arith.constant 8 : index
    %c0_25 = arith.constant 0 : index
    %50 = vector.load %arg1[%c0_24, %c8, %c0_25] : memref<1x25x128xf32, #tpu.memory_space<vmem>>, vector<1x1x128xf32>
    %51 = vector.shape_cast %50 : vector<1x1x128xf32> to vector<1x128xf32>
    %52 = vector.broadcast %51 : vector<1x128xf32> to vector<24x128xf32>
    %53 = arith.mulf %52, %49 : vector<24x128xf32>
    %54 = arith.addf %48, %53 : vector<24x128xf32>
    %c126_i32_26 = arith.constant 126 : i32
    %55 = tpu.dynamic_rotate %31 by %c126_i32_26 dim 1 : vector<24x128xf32>, i32 -> vector<24x128xf32>
    %c0_27 = arith.constant 0 : index
    %c9 = arith.constant 9 : index
    %c0_28 = arith.constant 0 : index
    %56 = vector.load %arg1[%c0_27, %c9, %c0_28] : memref<1x25x128xf32, #tpu.memory_space<vmem>>, vector<1x1x128xf32>
    %57 = vector.shape_cast %56 : vector<1x1x128xf32> to vector<1x128xf32>
    %58 = vector.broadcast %57 : vector<1x128xf32> to vector<24x128xf32>
    %59 = arith.mulf %58, %55 : vector<24x128xf32>
    %60 = arith.addf %54, %59 : vector<24x128xf32>
    %c2_i32_29 = arith.constant 2 : i32
    %61 = tpu.dynamic_rotate %1 by %c2_i32_29 dim 1 : vector<24x128xf32>, i32 -> vector<24x128xf32>
    %c0_30 = arith.constant 0 : index
    %c10 = arith.constant 10 : index
    %c0_31 = arith.constant 0 : index
    %62 = vector.load %arg1[%c0_30, %c10, %c0_31] : memref<1x25x128xf32, #tpu.memory_space<vmem>>, vector<1x1x128xf32>
    %63 = vector.shape_cast %62 : vector<1x1x128xf32> to vector<1x128xf32>
    %64 = vector.broadcast %63 : vector<1x128xf32> to vector<24x128xf32>
    %65 = arith.mulf %64, %61 : vector<24x128xf32>
    %66 = arith.addf %60, %65 : vector<24x128xf32>
    %c1_i32_32 = arith.constant 1 : i32
    %67 = tpu.dynamic_rotate %1 by %c1_i32_32 dim 1 : vector<24x128xf32>, i32 -> vector<24x128xf32>
    %c0_33 = arith.constant 0 : index
    %c11 = arith.constant 11 : index
    %c0_34 = arith.constant 0 : index
    %68 = vector.load %arg1[%c0_33, %c11, %c0_34] : memref<1x25x128xf32, #tpu.memory_space<vmem>>, vector<1x1x128xf32>
    %69 = vector.shape_cast %68 : vector<1x1x128xf32> to vector<1x128xf32>
    %70 = vector.broadcast %69 : vector<1x128xf32> to vector<24x128xf32>
    %71 = arith.mulf %70, %67 : vector<24x128xf32>
    %72 = arith.addf %66, %71 : vector<24x128xf32>
    %c0_35 = arith.constant 0 : index
    %c12 = arith.constant 12 : index
    %c0_36 = arith.constant 0 : index
    %73 = vector.load %arg1[%c0_35, %c12, %c0_36] : memref<1x25x128xf32, #tpu.memory_space<vmem>>, vector<1x1x128xf32>
    %74 = vector.shape_cast %73 : vector<1x1x128xf32> to vector<1x128xf32>
    %75 = vector.broadcast %74 : vector<1x128xf32> to vector<24x128xf32>
    %76 = arith.mulf %75, %1 : vector<24x128xf32>
    %77 = arith.addf %72, %76 : vector<24x128xf32>
    %c127_i32_37 = arith.constant 127 : i32
    %78 = tpu.dynamic_rotate %1 by %c127_i32_37 dim 1 : vector<24x128xf32>, i32 -> vector<24x128xf32>
    %c0_38 = arith.constant 0 : index
    %c13 = arith.constant 13 : index
    %c0_39 = arith.constant 0 : index
    %79 = vector.load %arg1[%c0_38, %c13, %c0_39] : memref<1x25x128xf32, #tpu.memory_space<vmem>>, vector<1x1x128xf32>
    %80 = vector.shape_cast %79 : vector<1x1x128xf32> to vector<1x128xf32>
    %81 = vector.broadcast %80 : vector<1x128xf32> to vector<24x128xf32>
    %82 = arith.mulf %81, %78 : vector<24x128xf32>
    %83 = arith.addf %77, %82 : vector<24x128xf32>
    %c126_i32_40 = arith.constant 126 : i32
    %84 = tpu.dynamic_rotate %1 by %c126_i32_40 dim 1 : vector<24x128xf32>, i32 -> vector<24x128xf32>
    %c0_41 = arith.constant 0 : index
    %c14 = arith.constant 14 : index
    %c0_42 = arith.constant 0 : index
    %85 = vector.load %arg1[%c0_41, %c14, %c0_42] : memref<1x25x128xf32, #tpu.memory_space<vmem>>, vector<1x1x128xf32>
    %86 = vector.shape_cast %85 : vector<1x1x128xf32> to vector<1x128xf32>
    %87 = vector.broadcast %86 : vector<1x128xf32> to vector<24x128xf32>
    %88 = arith.mulf %87, %84 : vector<24x128xf32>
    %89 = arith.addf %83, %88 : vector<24x128xf32>
    %c23_i32 = arith.constant 23 : i32
    %90 = tpu.dynamic_rotate %1 by %c23_i32 dim 0 : vector<24x128xf32>, i32 -> vector<24x128xf32>
    %c2_i32_43 = arith.constant 2 : i32
    %91 = tpu.dynamic_rotate %90 by %c2_i32_43 dim 1 : vector<24x128xf32>, i32 -> vector<24x128xf32>
    %c0_44 = arith.constant 0 : index
    %c15 = arith.constant 15 : index
    %c0_45 = arith.constant 0 : index
    %92 = vector.load %arg1[%c0_44, %c15, %c0_45] : memref<1x25x128xf32, #tpu.memory_space<vmem>>, vector<1x1x128xf32>
    %93 = vector.shape_cast %92 : vector<1x1x128xf32> to vector<1x128xf32>
    %94 = vector.broadcast %93 : vector<1x128xf32> to vector<24x128xf32>
    %95 = arith.mulf %94, %91 : vector<24x128xf32>
    %96 = arith.addf %89, %95 : vector<24x128xf32>
    %c1_i32_46 = arith.constant 1 : i32
    %97 = tpu.dynamic_rotate %90 by %c1_i32_46 dim 1 : vector<24x128xf32>, i32 -> vector<24x128xf32>
    %c0_47 = arith.constant 0 : index
    %c16 = arith.constant 16 : index
    %c0_48 = arith.constant 0 : index
    %98 = vector.load %arg1[%c0_47, %c16, %c0_48] : memref<1x25x128xf32, #tpu.memory_space<vmem>>, vector<1x1x128xf32>
    %99 = vector.shape_cast %98 : vector<1x1x128xf32> to vector<1x128xf32>
    %100 = vector.broadcast %99 : vector<1x128xf32> to vector<24x128xf32>
    %101 = arith.mulf %100, %97 : vector<24x128xf32>
    %102 = arith.addf %96, %101 : vector<24x128xf32>
    %c0_49 = arith.constant 0 : index
    %c17 = arith.constant 17 : index
    %c0_50 = arith.constant 0 : index
    %103 = vector.load %arg1[%c0_49, %c17, %c0_50] : memref<1x25x128xf32, #tpu.memory_space<vmem>>, vector<1x1x128xf32>
    %104 = vector.shape_cast %103 : vector<1x1x128xf32> to vector<1x128xf32>
    %105 = vector.broadcast %104 : vector<1x128xf32> to vector<24x128xf32>
    %106 = arith.mulf %105, %90 : vector<24x128xf32>
    %107 = arith.addf %102, %106 : vector<24x128xf32>
    %c127_i32_51 = arith.constant 127 : i32
    %108 = tpu.dynamic_rotate %90 by %c127_i32_51 dim 1 : vector<24x128xf32>, i32 -> vector<24x128xf32>
    %c0_52 = arith.constant 0 : index
    %c18 = arith.constant 18 : index
    %c0_53 = arith.constant 0 : index
    %109 = vector.load %arg1[%c0_52, %c18, %c0_53] : memref<1x25x128xf32, #tpu.memory_space<vmem>>, vector<1x1x128xf32>
    %110 = vector.shape_cast %109 : vector<1x1x128xf32> to vector<1x128xf32>
    %111 = vector.broadcast %110 : vector<1x128xf32> to vector<24x128xf32>
    %112 = arith.mulf %111, %108 : vector<24x128xf32>
    %113 = arith.addf %107, %112 : vector<24x128xf32>
    %c126_i32_54 = arith.constant 126 : i32
    %114 = tpu.dynamic_rotate %90 by %c126_i32_54 dim 1 : vector<24x128xf32>, i32 -> vector<24x128xf32>
    %c0_55 = arith.constant 0 : index
    %c19 = arith.constant 19 : index
    %c0_56 = arith.constant 0 : index
    %115 = vector.load %arg1[%c0_55, %c19, %c0_56] : memref<1x25x128xf32, #tpu.memory_space<vmem>>, vector<1x1x128xf32>
    %116 = vector.shape_cast %115 : vector<1x1x128xf32> to vector<1x128xf32>
    %117 = vector.broadcast %116 : vector<1x128xf32> to vector<24x128xf32>
    %118 = arith.mulf %117, %114 : vector<24x128xf32>
    %119 = arith.addf %113, %118 : vector<24x128xf32>
    %c22_i32 = arith.constant 22 : i32
    %120 = tpu.dynamic_rotate %1 by %c22_i32 dim 0 : vector<24x128xf32>, i32 -> vector<24x128xf32>
    %c2_i32_57 = arith.constant 2 : i32
    %121 = tpu.dynamic_rotate %120 by %c2_i32_57 dim 1 : vector<24x128xf32>, i32 -> vector<24x128xf32>
    %c0_58 = arith.constant 0 : index
    %c20 = arith.constant 20 : index
    %c0_59 = arith.constant 0 : index
    %122 = vector.load %arg1[%c0_58, %c20, %c0_59] : memref<1x25x128xf32, #tpu.memory_space<vmem>>, vector<1x1x128xf32>
    %123 = vector.shape_cast %122 : vector<1x1x128xf32> to vector<1x128xf32>
    %124 = vector.broadcast %123 : vector<1x128xf32> to vector<24x128xf32>
    %125 = arith.mulf %124, %121 : vector<24x128xf32>
    %126 = arith.addf %119, %125 : vector<24x128xf32>
    %c1_i32_60 = arith.constant 1 : i32
    %127 = tpu.dynamic_rotate %120 by %c1_i32_60 dim 1 : vector<24x128xf32>, i32 -> vector<24x128xf32>
    %c0_61 = arith.constant 0 : index
    %c21 = arith.constant 21 : index
    %c0_62 = arith.constant 0 : index
    %128 = vector.load %arg1[%c0_61, %c21, %c0_62] : memref<1x25x128xf32, #tpu.memory_space<vmem>>, vector<1x1x128xf32>
    %129 = vector.shape_cast %128 : vector<1x1x128xf32> to vector<1x128xf32>
    %130 = vector.broadcast %129 : vector<1x128xf32> to vector<24x128xf32>
    %131 = arith.mulf %130, %127 : vector<24x128xf32>
    %132 = arith.addf %126, %131 : vector<24x128xf32>
    %c0_63 = arith.constant 0 : index
    %c22 = arith.constant 22 : index
    %c0_64 = arith.constant 0 : index
    %133 = vector.load %arg1[%c0_63, %c22, %c0_64] : memref<1x25x128xf32, #tpu.memory_space<vmem>>, vector<1x1x128xf32>
    %134 = vector.shape_cast %133 : vector<1x1x128xf32> to vector<1x128xf32>
    %135 = vector.broadcast %134 : vector<1x128xf32> to vector<24x128xf32>
    %136 = arith.mulf %135, %120 : vector<24x128xf32>
    %137 = arith.addf %132, %136 : vector<24x128xf32>
    %c127_i32_65 = arith.constant 127 : i32
    %138 = tpu.dynamic_rotate %120 by %c127_i32_65 dim 1 : vector<24x128xf32>, i32 -> vector<24x128xf32>
    %c0_66 = arith.constant 0 : index
    %c23 = arith.constant 23 : index
    %c0_67 = arith.constant 0 : index
    %139 = vector.load %arg1[%c0_66, %c23, %c0_67] : memref<1x25x128xf32, #tpu.memory_space<vmem>>, vector<1x1x128xf32>
    %140 = vector.shape_cast %139 : vector<1x1x128xf32> to vector<1x128xf32>
    %141 = vector.broadcast %140 : vector<1x128xf32> to vector<24x128xf32>
    %142 = arith.mulf %141, %138 : vector<24x128xf32>
    %143 = arith.addf %137, %142 : vector<24x128xf32>
    %c126_i32_68 = arith.constant 126 : i32
    %144 = tpu.dynamic_rotate %120 by %c126_i32_68 dim 1 : vector<24x128xf32>, i32 -> vector<24x128xf32>
    %c0_69 = arith.constant 0 : index
    %c24 = arith.constant 24 : index
    %c0_70 = arith.constant 0 : index
    %145 = vector.load %arg1[%c0_69, %c24, %c0_70] : memref<1x25x128xf32, #tpu.memory_space<vmem>>, vector<1x1x128xf32>
    %146 = vector.shape_cast %145 : vector<1x1x128xf32> to vector<1x128xf32>
    %147 = vector.broadcast %146 : vector<1x128xf32> to vector<24x128xf32>
    %148 = arith.mulf %147, %144 : vector<24x128xf32>
    %149 = arith.addf %143, %148 : vector<24x128xf32>
    %c0_71 = arith.constant 0 : index
    %c0_72 = arith.constant 0 : index
    %c0_73 = arith.constant 0 : index
    %150 = vector.load %arg2[%c0_71, %c0_72, %c0_73] : memref<1x1x128xf32, #tpu.memory_space<vmem>>, vector<1x1x128xf32>
    %151 = vector.shape_cast %150 : vector<1x1x128xf32> to vector<1x128xf32>
    %152 = math.absf %149 : vector<24x128xf32>
    %153 = vector.broadcast %151 : vector<1x128xf32> to vector<24x128xf32>
    %154 = arith.cmpf ogt, %152, %153 : vector<24x128xf32>
    %cst = arith.constant 0.000000e+00 : f32
    %155 = vector.broadcast %cst : f32 to vector<24x128xf32>
    %156 = arith.select %154, %149, %155 : vector<24x128xi1>, vector<24x128xf32>
    %c0_74 = arith.constant 0 : index
    %c0_75 = arith.constant 0 : index
    %c0_76 = arith.constant 0 : index
    %157 = vector.load %arg4[%c0_74, %c0_75, %c0_76] : memref<1x24x128xf32, #tpu.memory_space<vmem>>, vector<1x24x128xf32>
    %158 = vector.shape_cast %157 : vector<1x24x128xf32> to vector<24x128xf32>
    %159 = vector.shape_cast %156 : vector<24x128xf32> to vector<1x24x128xf32>
    tpu.vector_store %arg4[%c0_74, %c0_75, %c0_76], %159 {strides = array<i32>} : memref<1x24x128xf32, #tpu.memory_space<vmem>>, vector<1x24x128xf32>,
    return
  }
  func.func @transform_0(%arg0: i32) -> (i32, i32, i32) {
    %c0_i32 = arith.constant 0 : i32
    %c0_i32_0 = arith.constant 0 : i32
    %c0_i32_1 = arith.constant 0 : i32
    return %arg0, %c0_i32, %c0_i32_0 : i32, i32, i32
  }
  func.func @transform_1(%arg0: i32) -> (i32, i32, i32) {
    %c0_i32 = arith.constant 0 : i32
    %c0_i32_0 = arith.constant 0 : i32
    %c0_i32_1 = arith.constant 0 : i32
    return %arg0, %c0_i32, %c0_i32_0 : i32, i32, i32
  }
  func.func @transform_2(%arg0: i32) -> (i32, i32, i32) {
    %c0_i32 = arith.constant 0 : i32
    %c0_i32_0 = arith.constant 0 : i32
    %c0_i32_1 = arith.constant 0 : i32
    return %arg0, %c0_i32, %c0_i32_0 : i32, i32, i32
  }
  func.func @transform_3(%arg0: i32) -> (i32, i32, i32) {
    %c0_i32 = arith.constant 0 : i32
    %c0_i32_0 = arith.constant 0 : i32
    %c0_i32_1 = arith.constant 0 : i32
    return %arg0, %c0_i32, %c0_i32_0 : i32, i32, i32
  }
}

</mosaic_0001>

<llo_original>
// kernel: tile.16
$region0: #{tile.16}
  #allocation0 [shape = 's32[1]{0}', space=sflag, size = 0x4, scoped, tag = 'scoped memory for tile.16']
  %s0 = inlined_call_operand.vmem [shape: f32[3], index: 0, kind: input, shape index: {}]
  %s1 = inlined_call_operand.vmem [shape: f32[2,3], index: 1, kind: output, shape index: {}]
  // Predicated region
  $region2: #{tile.16} parent=0 // pred_check
    _
  $region3: #{tile.16} parent=0 // pred_check_branch
    %3 = sbr.rel (0) target = $region5
  $region4: #{tile.16} parent=0 // pred_region
    _
  $region5: #{tile.16} parent=0 // pred_fallthru
    _
  %v4 = vld [vmem:[%s0] ss:$0 sm:$0xff]
  %5 = vst [vmem:[%s1] sm:$0x3] %v4

// kernel: lp_gabor_frontend_forward.1
$region0: #{lp_gabor_frontend_forward.1}
  #allocation0 [shape = 'u32[]', space=smem, size = 0x4, offset = 0x4, fixed_abs, tag = 'smem constant byte address 0x4 - core index']
  #allocation1 [shape = 'u32[144,128]{1,0:T(1,128)}', space=vmem, size = 0x12000, scoped, tag = 'internal scratch']
  %s0 = inlined_call_operand.vmem [shape: f32[1,25,128], index: 0, kind: input, shape index: {}]
  %s1 = inlined_call_operand.vmem [shape: f32[1,1,128], index: 1, kind: input, shape index: {}]
  %s2 = inlined_call_operand.vmem [shape: f32[1,24,128], index: 2, kind: input, shape index: {}]
  %s3 = inlined_call_operand.vmem [shape: f32[1,24,128], index: 3, kind: output, shape index: {}]
  %s4 = sld [smem:[#allocation0]]
  $region22: #{lp_gabor_frontend_forward.1} parent=0
    _
  %s6 = ssub.s32 1, %s4
  %s7 = scalar_select 0, %s6, %s4
  // Predicated region
  $region2: #{lp_gabor_frontend_forward.1} parent=0 // pred_check
    _
  $region3: #{lp_gabor_frontend_forward.1} parent=0 // pred_check_branch
    %9 = sbr.rel (0) target = $region5
  $region4: #{lp_gabor_frontend_forward.1} parent=0 // pred_region
    _
  $region5: #{lp_gabor_frontend_forward.1} parent=0 // pred_fallthru
    _
  // Predicated region
  $region6: #{lp_gabor_frontend_forward.1} parent=0 // pred_check
    _
  $region7: #{lp_gabor_frontend_forward.1} parent=0 // pred_check_branch
    %11 = sbr.rel (0) target = $region9
  $region8: #{lp_gabor_frontend_forward.1} parent=0 // pred_region
    _
  $region9: #{lp_gabor_frontend_forward.1} parent=0 // pred_fallthru
    _
  // Predicated region
  $region10: #{lp_gabor_frontend_forward.1} parent=0 // pred_check
    _
  $region11: #{lp_gabor_frontend_forward.1} parent=0 // pred_check_branch
    %13 = sbr.rel (0) target = $region13
  $region12: #{lp_gabor_frontend_forward.1} parent=0 // pred_region
    _
  $region13: #{lp_gabor_frontend_forward.1} parent=0 // pred_fallthru
    _
  %v14 = vld [vmem:[%s2] sm:$0xff]
  %v15 = vld [vmem:[%s2 + $0x8] sm:$0xff]
  %v16 = vld [vmem:[%s2 + $0x10] sm:$0xff]
  %v17 = vrot.slane %v14, 6
  %v18 = vrot.slane %v15, 6
  %v19 = vrot.slane %v16, 6
  %v20 = vlaneseq
  %v21 = vshrl.u32 %v20, 7
  %vm22 = vcmp.lt.s32.totalorder %v21, 2
  %v23 = vsel %vm22, %v18, %v19
  %v24 = vsel %vm22, %v17, %v18
  %v25 = vsel %vm22, %v19, %v17
  %26 = vrot.lane.b32.xlu0 %v25, 2
  %v27 = vpop.permute.xlu0 %26
  %28 = vrot.lane.b32.xlu0 %v24, 2
  %v29 = vpop.permute.xlu0 %28
  %30 = vrot.lane.b32.xlu0 %v23, 2
  %v31 = vpop.permute.xlu0 %30
  %v32 = vld [vmem:[%s0] sm:$0x1]
  %v33 = vlaneseq
  %v34 = vshrl.u32 %v33, 7
  %v35 = vsub.s32 0, %v34
  %v36 = vrot.slane %v32, %v35
  %v37 = vmul.f32 %v36, %v27
  %v38 = vmul.f32 %v36, %v29
  %v39 = vmul.f32 %v36, %v31
  %40 = vrot.lane.b32.xlu0 %v25, 1
  %v41 = vpop.permute.xlu0 %40
  %42 = vrot.lane.b32.xlu0 %v24, 1
  %v43 = vpop.permute.xlu0 %42
  %44 = vrot.lane.b32.xlu0 %v23, 1
  %v45 = vpop.permute.xlu0 %44
  %v46 = vld [vmem:[%s0 + $0x1] sm:$0x1]
  %v47 = vlaneseq
  %v48 = vshrl.u32 %v47, 7
  %v49 = vsub.s32 0, %v48
  %v50 = vrot.slane %v46, %v49
  %v51 = vmul.f32 %v50, %v41
  %v52 = vmul.f32 %v50, %v43
  %v53 = vmul.f32 %v50, %v45
  %v54 = vadd.f32 %v37, %v51
  %v55 = vadd.f32 %v38, %v52
  %v56 = vadd.f32 %v39, %v53
  %v57 = vld [vmem:[%s0 + $0x2] sm:$0x1]
  %v58 = vlaneseq
  %v59 = vshrl.u32 %v58, 7
  %v60 = vsub.s32 0, %v59
  %v61 = vrot.slane %v57, %v60
  %v62 = vmul.f32 %v61, %v25
  %v63 = vmul.f32 %v61, %v24
  %v64 = vmul.f32 %v61, %v23
  %v65 = vadd.f32 %v54, %v62
  %v66 = vadd.f32 %v55, %v63
  %v67 = vadd.f32 %v56, %v64
  %68 = vrot.lane.b32.xlu0 %v25, 127
  %v69 = vpop.permute.xlu0 %68
  %70 = vrot.lane.b32.xlu0 %v24, 127
  %v71 = vpop.permute.xlu0 %70
  %72 = vrot.lane.b32.xlu0 %v23, 127
  %v73 = vpop.permute.xlu0 %72
  %v74 = vld [vmem:[%s0 + $0x3] sm:$0x1]
  %v75 = vlaneseq
  %v76 = vshrl.u32 %v75, 7
  %v77 = vsub.s32 0, %v76
  %v78 = vrot.slane %v74, %v77
  %v79 = vmul.f32 %v78, %v69
  %v80 = vmul.f32 %v78, %v71
  %v81 = vmul.f32 %v78, %v73
  %v82 = vadd.f32 %v65, %v79
  %v83 = vadd.f32 %v66, %v80
  %v84 = vadd.f32 %v67, %v81
  %85 = vrot.lane.b32.xlu0 %v25, 126
  %v86 = vpop.permute.xlu0 %85
  %87 = vrot.lane.b32.xlu0 %v24, 126
  %v88 = vpop.permute.xlu0 %87
  %89 = vrot.lane.b32.xlu0 %v23, 126
  %v90 = vpop.permute.xlu0 %89
  %v91 = vld [vmem:[%s0 + $0x4] sm:$0x1]
  %v92 = vlaneseq
  %v93 = vshrl.u32 %v92, 7
  %v94 = vsub.s32 0, %v93
  %v95 = vrot.slane %v91, %v94
  %v96 = vmul.f32 %v95, %v86
  %v97 = vmul.f32 %v95, %v88
  %v98 = vmul.f32 %v95, %v90
  %v99 = vadd.f32 %v82, %v96
  %v100 = vadd.f32 %v83, %v97
  %v101 = vadd.f32 %v84, %v98
  %v102 = vrot.slane %v14, 7
  %v103 = vrot.slane %v15, 7
  %v104 = vrot.slane %v16, 7
  %vm105 = vcmp.lt.s32.totalorder %v21, 1
  %v106 = vsel %vm105, %v103, %v104
  %v107 = vsel %vm105, %v102, %v103
  %v108 = vsel %vm105, %v104, %v102
  %109 = vrot.lane.b32.xlu0 %v108, 2
  %v110 = vpop.permute.xlu0 %109
  %111 = vrot.lane.b32.xlu0 %v107, 2
  %v112 = vpop.permute.xlu0 %111
  %113 = vrot.lane.b32.xlu0 %v106, 2
  %v114 = vpop.permute.xlu0 %113
  %v115 = vld [vmem:[%s0 + $0x5] sm:$0x1]
  %v116 = vlaneseq
  %v117 = vshrl.u32 %v116, 7
  %v118 = vsub.s32 0, %v117
  %v119 = vrot.slane %v115, %v118
  %v120 = vmul.f32 %v119, %v110
  %v121 = vmul.f32 %v119, %v112
  %v122 = vmul.f32 %v119, %v114
  %v123 = vadd.f32 %v99, %v120
  %v124 = vadd.f32 %v100, %v121
  %v125 = vadd.f32 %v101, %v122
  %126 = vrot.lane.b32.xlu0 %v108, 1
  %v127 = vpop.permute.xlu0 %126
  %128 = vrot.lane.b32.xlu0 %v107, 1
  %v129 = vpop.permute.xlu0 %128
  %130 = vrot.lane.b32.xlu0 %v106, 1
  %v131 = vpop.permute.xlu0 %130
  %v132 = vld [vmem:[%s0 + $0x6] sm:$0x1]
  %v133 = vlaneseq
  %v134 = vshrl.u32 %v133, 7
  %v135 = vsub.s32 0, %v134
  %v136 = vrot.slane %v132, %v135
  %v137 = vmul.f32 %v136, %v127
  %v138 = vmul.f32 %v136, %v129
  %v139 = vmul.f32 %v136, %v131
  %v140 = vadd.f32 %v123, %v137
  %v141 = vadd.f32 %v124, %v138
  %v142 = vadd.f32 %v125, %v139
  %v143 = vld [vmem:[%s0 + $0x7] sm:$0x1]
  %v144 = vlaneseq
  %v145 = vshrl.u32 %v144, 7
  %v146 = vsub.s32 0, %v145
  %v147 = vrot.slane %v143, %v146
  %v148 = vmul.f32 %v147, %v108
  %v149 = vmul.f32 %v147, %v107
  %v150 = vmul.f32 %v147, %v106
  %v151 = vadd.f32 %v140, %v148
  %v152 = vadd.f32 %v141, %v149
  %v153 = vadd.f32 %v142, %v150
  %154 = vrot.lane.b32.xlu0 %v108, 127
  %v155 = vpop.permute.xlu0 %154
  %156 = vrot.lane.b32.xlu0 %v107, 127
  %v157 = vpop.permute.xlu0 %156
  %158 = vrot.lane.b32.xlu0 %v106, 127
  %v159 = vpop.permute.xlu0 %158
  %v160 = vld [vmem:[%s0 + $0x8] sm:$0x1]
  %v161 = vlaneseq
  %v162 = vshrl.u32 %v161, 7
  %v163 = vsub.s32 0, %v162
  %v164 = vrot.slane %v160, %v163
  %v165 = vmul.f32 %v164, %v155
  %v166 = vmul.f32 %v164, %v157
  %v167 = vmul.f32 %v164, %v159
  %v168 = vadd.f32 %v151, %v165
  %v169 = vadd.f32 %v152, %v166
  %v170 = vadd.f32 %v153, %v167
  %171 = vrot.lane.b32.xlu0 %v108, 126
  %v172 = vpop.permute.xlu0 %171
  %173 = vrot.lane.b32.xlu0 %v107, 126
  %v174 = vpop.permute.xlu0 %173
  %175 = vrot.lane.b32.xlu0 %v106, 126
  %v176 = vpop.permute.xlu0 %175
  %v177 = vld [vmem:[%s0 + $0x9] sm:$0x1]
  %v178 = vlaneseq
  %v179 = vshrl.u32 %v178, 7
  %v180 = vsub.s32 0, %v179
  %v181 = vrot.slane %v177, %v180
  %v182 = vmul.f32 %v181, %v172
  %v183 = vmul.f32 %v181, %v174
  %v184 = vmul.f32 %v181, %v176
  %v185 = vadd.f32 %v168, %v182
  %v186 = vadd.f32 %v169, %v183
  %v187 = vadd.f32 %v170, %v184
  %188 = vrot.lane.b32.xlu0 %v14, 2
  %v189 = vpop.permute.xlu0 %188
  %190 = vrot.lane.b32.xlu0 %v15, 2
  %v191 = vpop.permute.xlu0 %190
  %192 = vrot.lane.b32.xlu0 %v16, 2
  %v193 = vpop.permute.xlu0 %192
  %v194 = vld [vmem:[%s0 + $0xa] sm:$0x1]
  %v195 = vlaneseq
  %v196 = vshrl.u32 %v195, 7
  %v197 = vsub.s32 0, %v196
  %v198 = vrot.slane %v194, %v197
  %v199 = vmul.f32 %v198, %v189
  %v200 = vmul.f32 %v198, %v191
  %v201 = vmul.f32 %v198, %v193
  %v202 = vadd.f32 %v185, %v199
  %v203 = vadd.f32 %v186, %v200
  %v204 = vadd.f32 %v187, %v201
  %205 = vrot.lane.b32.xlu0 %v14, 1
  %v206 = vpop.permute.xlu0 %205
  %207 = vrot.lane.b32.xlu0 %v15, 1
  %v208 = vpop.permute.xlu0 %207
  %209 = vrot.lane.b32.xlu0 %v16, 1
  %v210 = vpop.permute.xlu0 %209
  %v211 = vld [vmem:[%s0 + $0xb] sm:$0x1]
  %v212 = vlaneseq
  %v213 = vshrl.u32 %v212, 7
  %v214 = vsub.s32 0, %v213
  %v215 = vrot.slane %v211, %v214
  %v216 = vmul.f32 %v215, %v206
  %v217 = vmul.f32 %v215, %v208
  %v218 = vmul.f32 %v215, %v210
  %v219 = vadd.f32 %v202, %v216
  %v220 = vadd.f32 %v203, %v217
  %v221 = vadd.f32 %v204, %v218
  %v222 = vld [vmem:[%s0 + $0xc] sm:$0x1]
  %v223 = vlaneseq
  %v224 = vshrl.u32 %v223, 7
  %v225 = vsub.s32 0, %v224
  %v226 = vrot.slane %v222, %v225
  %v227 = vmul.f32 %v226, %v14
  %v228 = vmul.f32 %v226, %v15
  %v229 = vmul.f32 %v226, %v16
  %v230 = vadd.f32 %v219, %v227
  %v231 = vadd.f32 %v220, %v228
  %v232 = vadd.f32 %v221, %v229
  %233 = vrot.lane.b32.xlu0 %v14, 127
  %v234 = vpop.permute.xlu0 %233
  %235 = vrot.lane.b32.xlu0 %v15, 127
  %v236 = vpop.permute.xlu0 %235
  %237 = vrot.lane.b32.xlu0 %v16, 127
  %v238 = vpop.permute.xlu0 %237
  %v239 = vld [vmem:[%s0 + $0xd] sm:$0x1]
  %v240 = vlaneseq
  %v241 = vshrl.u32 %v240, 7
  %v242 = vsub.s32 0, %v241
  %v243 = vrot.slane %v239, %v242
  %v244 = vmul.f32 %v243, %v234
  %v245 = vmul.f32 %v243, %v236
  %v246 = vmul.f32 %v243, %v238
  %v247 = vadd.f32 %v230, %v244
  %v248 = vadd.f32 %v231, %v245
  %v249 = vadd.f32 %v232, %v246
  %250 = vrot.lane.b32.xlu0 %v14, 126
  %v251 = vpop.permute.xlu0 %250
  %252 = vrot.lane.b32.xlu0 %v15, 126
  %v253 = vpop.permute.xlu0 %252
  %254 = vrot.lane.b32.xlu0 %v16, 126
  %v255 = vpop.permute.xlu0 %254
  %v256 = vld [vmem:[%s0 + $0xe] sm:$0x1]
  %v257 = vlaneseq
  %v258 = vshrl.u32 %v257, 7
  %v259 = vsub.s32 0, %v258
  %v260 = vrot.slane %v256, %v259
  %v261 = vmul.f32 %v260, %v251
  %v262 = vmul.f32 %v260, %v253
  %v263 = vmul.f32 %v260, %v255
  %v264 = vadd.f32 %v247, %v261
  %v265 = vadd.f32 %v248, %v262
  %v266 = vadd.f32 %v249, %v263
  %v267 = vrot.slane %v14, 1
  %v268 = vrot.slane %v15, 1
  %v269 = vrot.slane %v16, 1
  %vm270 = vcmp.lt.s32.totalorder %v21, 7
  %v271 = vsel %vm270, %v268, %v269
  %v272 = vsel %vm270, %v267, %v268
  %v273 = vsel %vm270, %v269, %v267
  %274 = vrot.lane.b32.xlu0 %v272, 2
  %v275 = vpop.permute.xlu0 %274
  %276 = vrot.lane.b32.xlu0 %v271, 2
  %v277 = vpop.permute.xlu0 %276
  %278 = vrot.lane.b32.xlu0 %v273, 2
  %v279 = vpop.permute.xlu0 %278
  %v280 = vld [vmem:[%s0 + $0xf] sm:$0x1]
  %v281 = vlaneseq
  %v282 = vshrl.u32 %v281, 7
  %v283 = vsub.s32 0, %v282
  %v284 = vrot.slane %v280, %v283
  %v285 = vmul.f32 %v284, %v275
  %v286 = vmul.f32 %v284, %v277
  %v287 = vmul.f32 %v284, %v279
  %v288 = vadd.f32 %v264, %v285
  %v289 = vadd.f32 %v265, %v286
  %v290 = vadd.f32 %v266, %v287
  %291 = vrot.lane.b32.xlu0 %v272, 1
  %v292 = vpop.permute.xlu0 %291
  %293 = vrot.lane.b32.xlu0 %v271, 1
  %v294 = vpop.permute.xlu0 %293
  %295 = vrot.lane.b32.xlu0 %v273, 1
  %v296 = vpop.permute.xlu0 %295
  %v297 = vld [vmem:[%s0 + $0x10] sm:$0x1]
  %v298 = vlaneseq
  %v299 = vshrl.u32 %v298, 7
  %v300 = vsub.s32 0, %v299
  %v301 = vrot.slane %v297, %v300
  %v302 = vmul.f32 %v301, %v292
  %v303 = vmul.f32 %v301, %v294
  %v304 = vmul.f32 %v301, %v296
  %v305 = vadd.f32 %v288, %v302
  %v306 = vadd.f32 %v289, %v303
  %v307 = vadd.f32 %v290, %v304
  %v308 = vld [vmem:[%s0 + $0x11] sm:$0x1]
  %v309 = vlaneseq
  %v310 = vshrl.u32 %v309, 7
  %v311 = vsub.s32 0, %v310
  %v312 = vrot.slane %v308, %v311
  %v313 = vmul.f32 %v312, %v272
  %v314 = vmul.f32 %v312, %v271
  %v315 = vmul.f32 %v312, %v273
  %v316 = vadd.f32 %v305, %v313
  %v317 = vadd.f32 %v306, %v314
  %v318 = vadd.f32 %v307, %v315
  %319 = vrot.lane.b32.xlu0 %v272, 127
  %v320 = vpop.permute.xlu0 %319
  %321 = vrot.lane.b32.xlu0 %v271, 127
  %v322 = vpop.permute.xlu0 %321
  %323 = vrot.lane.b32.xlu0 %v273, 127
  %v324 = vpop.permute.xlu0 %323
  %v325 = vld [vmem:[%s0 + $0x12] sm:$0x1]
  %v326 = vlaneseq
  %v327 = vshrl.u32 %v326, 7
  %v328 = vsub.s32 0, %v327
  %v329 = vrot.slane %v325, %v328
  %v330 = vmul.f32 %v329, %v320
  %v331 = vmul.f32 %v329, %v322
  %v332 = vmul.f32 %v329, %v324
  %v333 = vadd.f32 %v316, %v330
  %v334 = vadd.f32 %v317, %v331
  %v335 = vadd.f32 %v318, %v332
  %336 = vrot.lane.b32.xlu0 %v272, 126
  %v337 = vpop.permute.xlu0 %336
  %338 = vrot.lane.b32.xlu0 %v271, 126
  %v339 = vpop.permute.xlu0 %338
  %340 = vrot.lane.b32.xlu0 %v273, 126
  %v341 = vpop.permute.xlu0 %340
  %v342 = vld [vmem:[%s0 + $0x13] sm:$0x1]
  %v343 = vlaneseq
  %v344 = vshrl.u32 %v343, 7
  %v345 = vsub.s32 0, %v344
  %v346 = vrot.slane %v342, %v345
  %v347 = vmul.f32 %v346, %v337
  %v348 = vmul.f32 %v346, %v339
  %v349 = vmul.f32 %v346, %v341
  %v350 = vadd.f32 %v333, %v347
  %v351 = vadd.f32 %v334, %v348
  %v352 = vadd.f32 %v335, %v349
  %v353 = vrot.slane %v14, 2
  %v354 = vrot.slane %v15, 2
  %v355 = vrot.slane %v16, 2
  %vm356 = vcmp.lt.s32.totalorder %v21, 6
  %v357 = vsel %vm356, %v354, %v355
  %v358 = vsel %vm356, %v353, %v354
  %v359 = vsel %vm356, %v355, %v353
  %360 = vrot.lane.b32.xlu0 %v358, 2
  %v361 = vpop.permute.xlu0 %360
  %362 = vrot.lane.b32.xlu0 %v357, 2
  %v363 = vpop.permute.xlu0 %362
  %364 = vrot.lane.b32.xlu0 %v359, 2
  %v365 = vpop.permute.xlu0 %364
  %v366 = vld [vmem:[%s0 + $0x14] sm:$0x1]
  %v367 = vlaneseq
  %v368 = vshrl.u32 %v367, 7
  %v369 = vsub.s32 0, %v368
  %v370 = vrot.slane %v366, %v369
  %v371 = vmul.f32 %v370, %v361
  %v372 = vmul.f32 %v370, %v363
  %v373 = vmul.f32 %v370, %v365
  %v374 = vadd.f32 %v350, %v371
  %v375 = vadd.f32 %v351, %v372
  %v376 = vadd.f32 %v352, %v373
  %377 = vrot.lane.b32.xlu0 %v358, 1
  %v378 = vpop.permute.xlu0 %377
  %379 = vrot.lane.b32.xlu0 %v357, 1
  %v380 = vpop.permute.xlu0 %379
  %381 = vrot.lane.b32.xlu0 %v359, 1
  %v382 = vpop.permute.xlu0 %381
  %v383 = vld [vmem:[%s0 + $0x15] sm:$0x1]
  %v384 = vlaneseq
  %v385 = vshrl.u32 %v384, 7
  %v386 = vsub.s32 0, %v385
  %v387 = vrot.slane %v383, %v386
  %v388 = vmul.f32 %v387, %v378
  %v389 = vmul.f32 %v387, %v380
  %v390 = vmul.f32 %v387, %v382
  %v391 = vadd.f32 %v374, %v388
  %v392 = vadd.f32 %v375, %v389
  %v393 = vadd.f32 %v376, %v390
  %v394 = vld [vmem:[%s0 + $0x16] sm:$0x1]
  %v395 = vlaneseq
  %v396 = vshrl.u32 %v395, 7
  %v397 = vsub.s32 0, %v396
  %v398 = vrot.slane %v394, %v397
  %v399 = vmul.f32 %v398, %v358
  %v400 = vmul.f32 %v398, %v357
  %v401 = vmul.f32 %v398, %v359
  %v402 = vadd.f32 %v391, %v399
  %v403 = vadd.f32 %v392, %v400
  %v404 = vadd.f32 %v393, %v401
  %405 = vrot.lane.b32.xlu0 %v358, 127
  %v406 = vpop.permute.xlu0 %405
  %407 = vrot.lane.b32.xlu0 %v357, 127
  %v408 = vpop.permute.xlu0 %407
  %409 = vrot.lane.b32.xlu0 %v359, 127
  %v410 = vpop.permute.xlu0 %409
  %v411 = vld [vmem:[%s0 + $0x17] sm:$0x1]
  %v412 = vlaneseq
  %v413 = vshrl.u32 %v412, 7
  %v414 = vsub.s32 0, %v413
  %v415 = vrot.slane %v411, %v414
  %v416 = vmul.f32 %v415, %v406
  %v417 = vmul.f32 %v415, %v408
  %v418 = vmul.f32 %v415, %v410
  %v419 = vadd.f32 %v402, %v416
  %v420 = vadd.f32 %v403, %v417
  %v421 = vadd.f32 %v404, %v418
  %422 = vrot.lane.b32.xlu0 %v358, 126
  %v423 = vpop.permute.xlu0 %422
  %424 = vrot.lane.b32.xlu0 %v357, 126
  %v425 = vpop.permute.xlu0 %424
  %426 = vrot.lane.b32.xlu0 %v359, 126
  %v427 = vpop.permute.xlu0 %426
  %v428 = vld [vmem:[%s0 + $0x18] sm:$0x1]
  %v429 = vlaneseq
  %v430 = vshrl.u32 %v429, 7
  %v431 = vsub.s32 0, %v430
  %v432 = vrot.slane %v428, %v431
  %v433 = vmul.f32 %v432, %v423
  %v434 = vmul.f32 %v432, %v425
  %v435 = vmul.f32 %v432, %v427
  %v436 = vadd.f32 %v419, %v433
  %v437 = vadd.f32 %v420, %v434
  %v438 = vadd.f32 %v421, %v435
  %v439 = vld [vmem:[%s1] sm:$0x1]
  %v440 = vand.u32 2147483647, %v436
  %v441 = vand.u32 2147483647, %v437
  %v442 = vand.u32 2147483647, %v438
  %v444 = vlaneseq
  %v445 = vshrl.u32 %v444, 7
  %v446 = vsub.s32 0, %v445
  %v447 = vrot.slane %v439, %v446
  %vm449 = vcmp.gt.f32.partialorder %v440, %v447
  %vm450 = vcmp.gt.f32.partialorder %v441, %v447
  %vm451 = vcmp.gt.f32.partialorder %v442, %v447
  %v452 = vsel %vm449, %v436, 0.0
  %v453 = vsel %vm450, %v437, 0.0
  %v454 = vsel %vm451, %v438, 0.0
  %455 = vst [vmem:[%s3] sm:$0xff] %v452
  %456 = vst [vmem:[%s3 + $0x8] sm:$0xff] %v453
  %457 = vst [vmem:[%s3 + $0x10] sm:$0xff] %v454
  // Predicated region
  $region14: #{lp_gabor_frontend_forward.1} parent=0 // pred_check
    _
  $region15: #{lp_gabor_frontend_forward.1} parent=0 // pred_check_branch
    %459 = sbr.rel (0) target = $region17
  $region16: #{lp_gabor_frontend_forward.1} parent=0 // pred_region
    _
  $region17: #{lp_gabor_frontend_forward.1} parent=0 // pred_fallthru
    _
  // Predicated region
  $region18: #{lp_gabor_frontend_forward.1} parent=0 // pred_check
    _
  $region19: #{lp_gabor_frontend_forward.1} parent=0 // pred_check_branch
    %461 = sbr.rel (0) target = $region21
  $region20: #{lp_gabor_frontend_forward.1} parent=0 // pred_region
    _
  $region21: #{lp_gabor_frontend_forward.1} parent=0 // pred_fallthru
    _

</llo_original>
